<compile_context>
chip_gen: v7x
topology: tpu7x:2x2x1
jax: 0.10.0
libtpu: 0.0.40
codegen_flags: <defaults>
</compile_context>

<pallas_src>
import jax
import jax.numpy as jnp
from jax.experimental import pallas as pl
from jax.experimental.pallas import tpu as pltpu


def _pos_enc_kernel(x_ref, p_ref, o_ref):
    # x_ref: VMEM (B, TS, D) tile of the input
    # p_ref: VMEM (TS, D) tile of the pre-gathered positional rows
    # o_ref: VMEM (B, TS, D) output tile
    o_ref[...] = x_ref[...] + p_ref[...][None]  # broadcast rows over batch (in-vreg)


def _pick_seq_tile(B, S, D, itemsize, vmem_budget_bytes=12 << 20):
    """Largest sequence tile (multiple of 8, or full S) that double-buffers
    (x tile + out tile + p tile) comfortably within a conservative VMEM budget
    that is safe on v5e (16 MiB scoped default) and v7x (64 MiB physical)."""
    if S <= 8:
        return S  # full-extent block satisfies the (8,128) rule
    # bytes per sequence row across all live buffers, x2 for double-buffering
    bytes_per_row = (2 * B + 1) * D * itemsize * 2
    ts = max(8, vmem_budget_bytes // max(bytes_per_row, 1))
    ts = min(ts, S)
    if ts < S:
        ts = max(8, (ts // 8) * 8)  # keep sublane-dense blocks
    return ts


def explicit_positional_encoding(x, positions, p_table):
    """x: (B, S, D); positions: (B, S) int; p_table: (max_len, D)."""
    B, S, D = x.shape

    # PyTorch: P[:, positions[0, :], :] -- gather once in the wrapper (cheap:
    # S*D elements vs. 2*B*S*D of X traffic), cast to x.dtype for a clean add.
    pos0 = positions[0].astype(jnp.int32)
    p_rows = jnp.take(p_table, pos0, axis=0).astype(x.dtype)  # (S, D)

    ts = _pick_seq_tile(B, S, D, x.dtype.itemsize)
    grid = (pl.cdiv(S, ts),)

    return pl.pallas_call(
        _pos_enc_kernel,
        out_shape=jax.ShapeDtypeStruct((B, S, D), x.dtype),
        grid_spec=pl.GridSpec(
            grid=grid,
            in_specs=[
                pl.BlockSpec((B, ts, D), lambda i: (0, i, 0)),  # X tile
                pl.BlockSpec((ts, D), lambda i: (i, 0)),        # gathered P tile
            ],
            out_specs=pl.BlockSpec((B, ts, D), lambda i: (0, i, 0)),
        ),
        compiler_params=pltpu.CompilerParams(
            dimension_semantics=("parallel",),  # static tiling -> megacore-shardable
        ),
    )(x, p_rows)


def make_sinusoid_table(max_len, d_model, dtype=jnp.float32):
    """Deterministic parameter construction mirroring the module's __init__.
    (Assumes even d_model, same as the PyTorch reference.)"""
    pos = jnp.arange(max_len, dtype=jnp.float32)[:, None]                    # (L, 1)
    div = jnp.power(
        10000.0, jnp.arange(0, d_model, 2, dtype=jnp.float32) / d_model)     # (D/2,)
    ang = pos / div                                                          # (L, D/2)
    P = jnp.zeros((max_len, d_model), dtype)
    P = P.at[:, 0::2].set(jnp.sin(ang).astype(dtype))
    P = P.at[:, 1::2].set(jnp.cos(ang).astype(dtype))
    return P


if __name__ == "__main__":
    B, S, D, MAX_LEN = 2, 8, 128, 64

    key = jax.random.PRNGKey(0)
    kx, kp = jax.random.split(key)
    x = jax.random.normal(kx, (B, S, D), dtype=jnp.float32)
    positions = jax.random.randint(kp, (B, S), 0, MAX_LEN, dtype=jnp.int32)

    p_table = make_sinusoid_table(MAX_LEN, D)

    out = explicit_positional_encoding(x, positions, p_table)
    out = jax.block_until_ready(out)

    # Pure-JAX reference (dropout p=0.0 is identity).
    ref = x + p_table[positions[0]][None, :, :]
    assert out.shape == (B, S, D)
    assert jnp.allclose(out, ref, atol=1e-6, rtol=1e-6)

    print("KERNEL_OK")
</pallas_src>

<mosaic_0001>
module attributes {stable_mosaic.version = 11 : i64} {
  func.func @_pos_enc_kernel(%arg0: i32, %arg1: memref<2x8x128xf32, #tpu.memory_space<vmem>>, %arg2: memref<8x128xf32, #tpu.memory_space<vmem>>, %arg3: memref<2x8x128xf32, #tpu.memory_space<vmem>>) attributes {dimension_semantics = [#tpu.dimension_semantics<parallel>], iteration_bounds = array<i64: 1>, scalar_prefetch = 0 : i64, scratch_operands = 0 : i64, tpu.core_type = #tpu.core_type<tc>, window_params = [{transform_indices = @transform_0, window_bounds = array<i64: 2, 8, 128>}, {transform_indices = @transform_1, window_bounds = array<i64: 8, 128>}, {transform_indices = @transform_2, window_bounds = array<i64: 2, 8, 128>}]} {
    %c0 = arith.constant 0 : index
    %c0_0 = arith.constant 0 : index
    %c0_1 = arith.constant 0 : index
    %0 = vector.load %arg1[%c0, %c0_0, %c0_1] : memref<2x8x128xf32, #tpu.memory_space<vmem>>, vector<2x8x128xf32>
    %c0_2 = arith.constant 0 : index
    %c0_3 = arith.constant 0 : index
    %1 = vector.load %arg2[%c0_2, %c0_3] : memref<8x128xf32, #tpu.memory_space<vmem>>, vector<8x128xf32>
    %2 = vector.shape_cast %1 : vector<8x128xf32> to vector<1x8x128xf32>
    %3 = vector.broadcast %2 : vector<1x8x128xf32> to vector<2x8x128xf32>
    %4 = arith.addf %0, %3 : vector<2x8x128xf32>
    %c0_4 = arith.constant 0 : index
    %c0_5 = arith.constant 0 : index
    %c0_6 = arith.constant 0 : index
    %5 = vector.load %arg3[%c0_4, %c0_5, %c0_6] : memref<2x8x128xf32, #tpu.memory_space<vmem>>, vector<2x8x128xf32>
    tpu.vector_store %arg3[%c0_4, %c0_5, %c0_6], %4 {strides = array<i32>} : memref<2x8x128xf32, #tpu.memory_space<vmem>>, vector<2x8x128xf32>,
    return
  }
  func.func @transform_0(%arg0: i32) -> (i32, i32, i32) {
    %c0_i32 = arith.constant 0 : i32
    %c0_i32_0 = arith.constant 0 : i32
    %c0_i32_1 = arith.constant 0 : i32
    return %c0_i32, %arg0, %c0_i32_0 : i32, i32, i32
  }
  func.func @transform_1(%arg0: i32) -> (i32, i32) {
    %c0_i32 = arith.constant 0 : i32
    %c0_i32_0 = arith.constant 0 : i32
    return %arg0, %c0_i32 : i32, i32
  }
  func.func @transform_2(%arg0: i32) -> (i32, i32, i32) {
    %c0_i32 = arith.constant 0 : i32
    %c0_i32_0 = arith.constant 0 : i32
    %c0_i32_1 = arith.constant 0 : i32
    return %c0_i32, %arg0, %c0_i32_0 : i32, i32, i32
  }
}

</mosaic_0001>

<llo_original>
// kernel: tpu_custom_call.1
$region0: #{tpu_custom_call.1}
  #allocation0 [shape = 'u32[]', space=smem, size = 0x4, offset = 0x4, fixed_abs, tag = 'smem constant byte address 0x4 - core index']
  #allocation1 [shape = 'u32[144,128]{1,0:T(1,128)}', space=vmem, size = 0x12000, scoped, tag = 'internal scratch']
  %s0 = inlined_call_operand.hbm [shape: f32[2,8,128], index: 0, kind: input, shape index: {}]
  %s1 = inlined_call_operand.hbm [shape: f32[8,128], index: 1, kind: input, shape index: {}]
  %s2 = inlined_call_operand.hbm [shape: f32[2,8,128], index: 2, kind: output, shape index: {}]
  %s3 = sld [smem:[#allocation0]]
  $region26: #{tpu_custom_call.1} parent=0
    _
  %s5 = ssub.s32 1, %s3
  %s6 = scalar_select 0, %s5, %s3
  $region1: #{tpu_custom_call.1} parent=0
    #allocation2 [shape = 'u8[8192]{0}', space=vmem, size = 0x2000, scoped, tag = 'input window, operand 0, single buffered']
    #allocation3 [shape = 's32[1]{0}', space=sflag, size = 0x4, scoped, tag = 'scoped memory for tpu_custom_call.1']
    #allocation4 [shape = 's32[1]{0}', space=sflag, size = 0x4, scoped, tag = 'scoped memory for tpu_custom_call.1']
    #allocation5 [shape = 'u8[4096]{0}', space=vmem, size = 0x1000, scoped, tag = 'input window, operand 1, single buffered']
    #allocation6 [shape = 's32[1]{0}', space=sflag, size = 0x4, scoped, tag = 'scoped memory for tpu_custom_call.1']
    #allocation7 [shape = 'u8[8192]{0}', space=vmem, size = 0x2000, scoped, tag = 'output window, operand 0, single buffered']
    %7 = vsyncpa [#allocation3], 0
    %8 = vsyncpa [#allocation6], 0
    %9 = vsyncpa [#allocation4], 0
    // Predicated region
    $region2: #{tpu_custom_call.1} parent=1 // pred_check
      _
    $region3: #{tpu_custom_call.1} parent=1 // pred_check_branch
      %11 = sbr.rel (0) target = $region5
    $region4: #{tpu_custom_call.1} parent=1 // pred_region
      %s13 = ssub.s32 256, 256
      %14 = vsyncadd [#allocation3], %s13
      %s15 = sshll.u32 [#allocation2], 4
      %s16 = int_to_ptr.vmem [resolvable:$true] %s15
      %21 = dma.hbm_to_vmem [thread:$0]  %s0, 256, %s16, [#allocation3], 128, 128, 8
    $region5: #{tpu_custom_call.1} parent=1 // pred_fallthru
      _
    // Predicated region
    $region6: #{tpu_custom_call.1} parent=1 // pred_check
      _
    $region7: #{tpu_custom_call.1} parent=1 // pred_check_branch
      %23 = sbr.rel (0) target = $region9
    $region8: #{tpu_custom_call.1} parent=1 // pred_region
      %s25 = ssub.s32 128, 128
      %26 = vsyncadd [#allocation6], %s25
      %s28 = sshll.u32 [#allocation5], 4
      %s29 = int_to_ptr.vmem [resolvable:$true] %s28
      %31 = dma.hbm_to_vmem [thread:$0]  %s1, 128, %s29, [#allocation6]
    $region9: #{tpu_custom_call.1} parent=1 // pred_fallthru
      _
    // Predicated region
    $region10: #{tpu_custom_call.1} parent=1 // pred_check
      _
    $region11: #{tpu_custom_call.1} parent=1 // pred_check_branch
      %33 = sbr.rel (0) target = $region13
    $region12: #{tpu_custom_call.1} parent=1 // pred_region
      %34 = dma.done [#allocation3], 256
    $region13: #{tpu_custom_call.1} parent=1 // pred_fallthru
      _
    // Predicated region
    $region14: #{tpu_custom_call.1} parent=1 // pred_check
      _
    $region15: #{tpu_custom_call.1} parent=1 // pred_check_branch
      %36 = sbr.rel (0) target = $region17
    $region16: #{tpu_custom_call.1} parent=1 // pred_region
      %37 = dma.done [#allocation6], 128
    $region17: #{tpu_custom_call.1} parent=1 // pred_fallthru
      _
    %v38 = vld [vmem:[#allocation2] sm:$0xff]
    %v39 = vld [vmem:[#allocation2 + $0x8] sm:$0xff]
    %v40 = vld [vmem:[#allocation5] sm:$0xff]
    %v41 = vadd.f32 %v38, %v40
    %v42 = vadd.f32 %v39, %v40
    %43 = vst [vmem:[#allocation7] sm:$0xff] %v41
    %44 = vst [vmem:[#allocation7 + $0x8] sm:$0xff] %v42
    // Predicated region
    $region18: #{tpu_custom_call.1} parent=1 // pred_check
      _
    $region19: #{tpu_custom_call.1} parent=1 // pred_check_branch
      %46 = sbr.rel (0) target = $region21
    $region20: #{tpu_custom_call.1} parent=1 // pred_region
      %s48 = ssub.s32 256, 256
      %49 = vsyncadd [#allocation4], %s48
      %s50 = sshll.u32 [#allocation7], 4
      %s51 = int_to_ptr.vmem [resolvable:$true] %s50
      %56 = dma.vmem_to_hbm [thread:$0]  %s51, 256, %s2, [#allocation4], 128, 128, 8
    $region21: #{tpu_custom_call.1} parent=1 // pred_fallthru
      _
    // Predicated region
    $region22: #{tpu_custom_call.1} parent=1 // pred_check
      _
    $region23: #{tpu_custom_call.1} parent=1 // pred_check_branch
      %58 = sbr.rel (0) target = $region25
    $region24: #{tpu_custom_call.1} parent=1 // pred_region
      %59 = dma.done [#allocation4], 256
    $region25: #{tpu_custom_call.1} parent=1 // pred_fallthru
      _
    %60 = vsyncpa [#allocation3], 1
    %61 = vsyncpa [#allocation6], 1
    %62 = vsyncpa [#allocation4], 1

</llo_original>
